<compile_context>
chip_gen: v7x
topology: tpu7x:2x2x1
jax: 0.10.0
libtpu: 0.0.40
codegen_flags: <defaults>
</compile_context>

<pallas_src>
import numpy as np
import jax
import jax.numpy as jnp
from jax.experimental import pallas as pl
from jax.experimental.pallas import tpu as pltpu


_TILE = 512  # adjT tile = 512x512 bf16 = 0.5 MiB (1 MiB double-buffered)


def _round_up(a, b):
    return ((a + b - 1) // b) * b


def _sigmoid(z):
    # exp + approximate reciprocal both issue to the (otherwise idle) EUP slot.
    return pl.reciprocal(1.0 + jnp.exp(-z), approx=True)


# ---------------------------------------------------------------------------
# Kernel 1: packed projection   projT = Wt @ x^T
# ---------------------------------------------------------------------------
def _proj_kernel(wT_ref, xT_ref, out_ref):
    out_ref[...] = jnp.dot(wT_ref[...], xT_ref[...],
                           preferred_element_type=jnp.float32)


# ---------------------------------------------------------------------------
# Kernel 2: gcn accumulation over adjT tiles + score/attention/softmax epilogue
# ---------------------------------------------------------------------------
def _score_kernel(scal_ref, adjT_ref, projk_ref, proji_ref, degT_ref,
                  out_ref, acc_ref):
    k = pl.program_id(1)

    @pl.when(k == 0)
    def _init():
        acc_ref[...] = jnp.zeros_like(acc_ref)

    # acc[8, TN] += projT[:, k-block] @ adjT[k-block, i-block]
    # row 2 of acc accumulates gcn^T = (x @ w_gnn)^T @ adjT (rows 0/1 unused).
    acc_ref[...] += jnp.dot(projk_ref[...].astype(jnp.bfloat16),
                            adjT_ref[...],
                            preferred_element_type=jnp.float32)

    @pl.when(k == pl.num_programs(1) - 1)
    def _finalize():
        alpha = scal_ref[0]
        beta = scal_ref[1]
        deg = degT_ref[...]                     # [1, TN]
        p = proji_ref[...]                      # [8, TN]  rows: mlp, lin, gnn
        acc = acc_ref[...]                      # [8, TN]

        s1 = _sigmoid(alpha * jnp.sqrt(deg) + beta)     # [1, TN]
        s2 = _sigmoid(p[0:1, :])                        # [1, TN]
        s3 = _sigmoid(acc[2:3, :] + p[1:2, :])          # [1, TN]

        # weight = attention(scores) = scores @ W_att^T + b_att  (SMEM scalars)
        w0 = scal_ref[2] * s1 + scal_ref[3] * s2 + scal_ref[4] * s3 + scal_ref[11]
        w1 = scal_ref[5] * s1 + scal_ref[6] * s2 + scal_ref[7] * s3 + scal_ref[12]
        w2 = scal_ref[8] * s1 + scal_ref[9] * s2 + scal_ref[10] * s3 + scal_ref[13]

        # softmax over the 3 score channels, then fitness = sum(weight * scores)
        m = jnp.maximum(jnp.maximum(w0, w1), w2)
        e0 = jnp.exp(w0 - m)
        e1 = jnp.exp(w1 - m)
        e2 = jnp.exp(w2 - m)
        inv = pl.reciprocal(e0 + e1 + e2, approx=True)
        out_ref[...] = (e0 * s1 + e1 * s2 + e2 * s3) * inv


# ---------------------------------------------------------------------------
# Glue + wrapper
# ---------------------------------------------------------------------------
def myscore_forward(params, x, edge_index):
    N, C = x.shape
    Cp = _round_up(C, 128)
    if N > _TILE:
        Np = _round_up(N, _TILE)
        TN = TK = _TILE
    else:
        Np = _round_up(N, 128)
        TN = TK = Np

    row, col = edge_index[0], edge_index[1]

    # degree(edge_index[1], num_nodes) for score1, built at padded size.
    deg = jnp.zeros((Np,), jnp.float32).at[col].add(1.0)
    degT = deg.reshape(1, Np)

    # GCN normalization (self-loops, D^-1/2 (A+I) D^-1/2, aggregate at target).
    # adjT[source, target] is scattered directly at padded size, in bf16.
    self_idx = jnp.arange(N, dtype=edge_index.dtype)
    row_sl = jnp.concatenate([row, self_idx])
    col_sl = jnp.concatenate([col, self_idx])
    deg_sl = jnp.zeros((Np,), jnp.float32).at[col_sl].add(1.0)
    dinv = jnp.where(deg_sl > 0, jax.lax.rsqrt(deg_sl), 0.0)
    norm = dinv[row_sl] * dinv[col_sl]
    adjT = jnp.zeros((Np, Np), jnp.bfloat16).at[row_sl, col_sl].add(
        norm.astype(jnp.bfloat16))

    # x^T padded to [Cp, Np] (small: C is tiny compared to N).
    xT = jnp.zeros((Cp, Np), jnp.float32).at[:C, :N].set(
        x.T.astype(jnp.float32))

    # Packed projection weights, transposed: rows 0=mlp, 1=linear, 2=gnn.
    wT = jnp.zeros((8, Cp), jnp.float32)
    wT = wT.at[0, :C].set(params["w_mlp"].astype(jnp.float32))
    wT = wT.at[1, :C].set(params["w_lin"].astype(jnp.float32))
    wT = wT.at[2, :C].set(params["w_gnn"].astype(jnp.float32))

    # Scalar parameter vector (SMEM): [alpha, beta, W_att(9, row-major), b_att(3)]
    scal = jnp.concatenate([
        jnp.asarray(params["alpha"], jnp.float32).reshape(1),
        jnp.asarray(params["beta"], jnp.float32).reshape(1),
        params["w_att"].astype(jnp.float32).reshape(9),
        params["b_att"].astype(jnp.float32).reshape(3),
    ])

    # ---- pass 1: projT[8, Np] = wT @ xT --------------------------------------
    projT = pl.pallas_call(
        _proj_kernel,
        out_shape=jax.ShapeDtypeStruct((8, Np), jnp.float32),
        grid=(Np // TN,),
        in_specs=[pl.BlockSpec((8, Cp), lambda j: (0, 0)),
                  pl.BlockSpec((Cp, TN), lambda j: (0, j))],
        out_specs=pl.BlockSpec((8, TN), lambda j: (0, j)),
        compiler_params=pltpu.CompilerParams(
            dimension_semantics=("parallel",)),
    )(wT, xT)

    # ---- pass 2: tiled gcn matvec + score/attention/softmax epilogue ---------
    out = pl.pallas_call(
        _score_kernel,
        out_shape=jax.ShapeDtypeStruct((1, Np), jnp.float32),
        grid=(Np // TN, Np // TK),
        in_specs=[
            pl.BlockSpec(memory_space=pltpu.MemorySpace.SMEM),      # scalars
            pl.BlockSpec((TK, TN), lambda i, k: (k, i)),            # adjT (bf16)
            pl.BlockSpec((8, TK), lambda i, k: (0, k)),             # projT (k view)
            pl.BlockSpec((8, TN), lambda i, k: (0, i)),             # projT (i view)
            pl.BlockSpec((1, TN), lambda i, k: (0, i)),             # degT
        ],
        out_specs=pl.BlockSpec((1, TN), lambda i, k: (0, i)),
        scratch_shapes=[pltpu.VMEM((8, TN), jnp.float32)],
        compiler_params=pltpu.CompilerParams(
            dimension_semantics=("parallel", "arbitrary"),
            vmem_limit_bytes=32 * 1024 * 1024),
    )(scal, adjT, projT, projT, degT)

    return out[0, :N]


def myscore_reference(params, x, edge_index):
    """Pure-JAX (f32) reference mirroring the PyTorch forward."""
    N = x.shape[0]
    row, col = edge_index[0], edge_index[1]
    deg = jnp.zeros((N,), jnp.float32).at[col].add(1.0)
    self_idx = jnp.arange(N, dtype=edge_index.dtype)
    row_sl = jnp.concatenate([row, self_idx])
    col_sl = jnp.concatenate([col, self_idx])
    deg_sl = jnp.zeros((N,), jnp.float32).at[col_sl].add(1.0)
    dinv = jnp.where(deg_sl > 0, jax.lax.rsqrt(deg_sl), 0.0)
    norm = dinv[row_sl] * dinv[col_sl]
    adj = jnp.zeros((N, N), jnp.float32).at[col_sl, row_sl].add(norm)

    s1 = jax.nn.sigmoid(params["alpha"] * jnp.sqrt(deg) + params["beta"])
    s2 = jax.nn.sigmoid(x @ params["w_mlp"])
    s3 = jax.nn.sigmoid(adj @ (x @ params["w_gnn"]) + x @ params["w_lin"])
    scores = jnp.stack([s1, s2, s3], axis=1)                 # [N, 3]
    w = jax.nn.softmax(scores @ params["w_att"].T + params["b_att"], axis=1)
    return jnp.sum(w * scores, axis=1)                       # [N]


if __name__ == "__main__":
    key = jax.random.PRNGKey(0)
    N, C = 8, 4
    k_x, k_mlp, k_lin, k_gnn, k_attw, k_attb = jax.random.split(key, 6)

    x = jax.random.normal(k_x, (N, C), jnp.float32)
    # deterministic graph: bidirectional ring + two bidirectional chords
    src = list(range(N)) + [(i + 1) % N for i in range(N)] + [0, 4, 2, 6]
    dst = [(i + 1) % N for i in range(N)] + list(range(N)) + [4, 0, 6, 2]
    edge_index = jnp.array([src, dst], dtype=jnp.int32)      # [2, 20]

    params = {
        "alpha": jnp.float32(1.0),
        "beta": jnp.float32(1.0),
        "w_mlp": jax.random.normal(k_mlp, (C,), jnp.float32) / jnp.sqrt(jnp.float32(C)),
        "w_lin": jax.random.normal(k_lin, (C,), jnp.float32) / jnp.sqrt(jnp.float32(C)),
        "w_gnn": jax.random.normal(k_gnn, (C,), jnp.float32) / jnp.sqrt(jnp.float32(C)),
        "w_att": jax.random.normal(k_attw, (3, 3), jnp.float32) / jnp.sqrt(jnp.float32(3)),
        "b_att": 0.1 * jax.random.normal(k_attb, (3,), jnp.float32),
    }

    fitness = jax.block_until_ready(myscore_forward(params, x, edge_index))
    ref = jax.block_until_ready(myscore_reference(params, x, edge_index))

    assert fitness.shape == (N,)
    # bf16 adjacency + approximate EUP reciprocal -> slightly looser tolerance
    np.testing.assert_allclose(np.asarray(fitness), np.asarray(ref),
                               rtol=1e-2, atol=1e-2)
    print("KERNEL_OK")
</pallas_src>

<mosaic_0001>
module attributes {stable_mosaic.version = 11 : i64} {
  func.func @_proj_kernel(%arg0: i32, %arg1: memref<8x128xf32, #tpu.memory_space<vmem>>, %arg2: memref<128x128xf32, #tpu.memory_space<vmem>>, %arg3: memref<8x128xf32, #tpu.memory_space<vmem>>) attributes {dimension_semantics = [#tpu.dimension_semantics<parallel>], iteration_bounds = array<i64: 1>, scalar_prefetch = 0 : i64, scratch_operands = 0 : i64, tpu.core_type = #tpu.core_type<tc>, window_params = [{pipeline_mode = #tpu.pipeline_mode<synchronous>, transform_indices = @transform_0, window_bounds = array<i64: 8, 128>}, {transform_indices = @transform_1, window_bounds = array<i64: 128, 128>}, {transform_indices = @transform_2, window_bounds = array<i64: 8, 128>}]} {
    %c0 = arith.constant 0 : index
    %c0_0 = arith.constant 0 : index
    %0 = vector.load %arg1[%c0, %c0_0] : memref<8x128xf32, #tpu.memory_space<vmem>>, vector<8x128xf32>
    %c0_1 = arith.constant 0 : index
    %c0_2 = arith.constant 0 : index
    %1 = vector.load %arg2[%c0_1, %c0_2] : memref<128x128xf32, #tpu.memory_space<vmem>>, vector<128x128xf32>
    %cst = arith.constant dense<0.000000e+00> : vector<8x128xf32>
    %2 = tpu.matmul %0, %1, %cst {dimension_numbers = #tpu.dot_dimension_numbers<[1], [0], [0], [1], [0, 0, 1, 1], [], []>} : vector<8x128xf32>, vector<128x128xf32>, vector<8x128xf32> -> vector<8x128xf32>
    %c0_3 = arith.constant 0 : index
    %c0_4 = arith.constant 0 : index
    %3 = vector.load %arg3[%c0_3, %c0_4] : memref<8x128xf32, #tpu.memory_space<vmem>>, vector<8x128xf32>
    tpu.vector_store %arg3[%c0_3, %c0_4], %2 {strides = array<i32>} : memref<8x128xf32, #tpu.memory_space<vmem>>, vector<8x128xf32>,
    return
  }
  func.func @transform_0(%arg0: i32) -> (i32, i32) {
    %c0_i32 = arith.constant 0 : i32
    %c0_i32_0 = arith.constant 0 : i32
    %c0_i32_1 = arith.constant 0 : i32
    return %c0_i32, %c0_i32_0 : i32, i32
  }
  func.func @transform_1(%arg0: i32) -> (i32, i32) {
    %c0_i32 = arith.constant 0 : i32
    %c0_i32_0 = arith.constant 0 : i32
    return %c0_i32, %arg0 : i32, i32
  }
  func.func @transform_2(%arg0: i32) -> (i32, i32) {
    %c0_i32 = arith.constant 0 : i32
    %c0_i32_0 = arith.constant 0 : i32
    return %c0_i32, %arg0 : i32, i32
  }
}

</mosaic_0001>

<llo_original>
// kernel: tpu_custom_call.1
$region0: #{tpu_custom_call.1}
  #allocation0 [shape = 'u32[]', space=smem, size = 0x4, offset = 0x4, fixed_abs, tag = 'smem constant byte address 0x4 - core index']
  #allocation1 [shape = 'u32[144,128]{1,0:T(1,128)}', space=vmem, size = 0x12000, scoped, tag = 'internal scratch']
  %s0 = inlined_call_operand.hbm [shape: f32[8,128], index: 0, kind: input, shape index: {}]
  %s1 = inlined_call_operand.hbm [shape: f32[128,128], index: 1, kind: input, shape index: {}]
  %s2 = inlined_call_operand.hbm [shape: f32[8,128], index: 2, kind: output, shape index: {}]
  %s3 = sld [smem:[#allocation0]]
  $region26: #{tpu_custom_call.1} parent=0
    _
  %s5 = ssub.s32 1, %s3
  %s6 = scalar_select 0, %s5, %s3
  $region1: #{tpu_custom_call.1} parent=0
    #allocation2 [shape = 'u8[4096]{0}', space=vmem, size = 0x1000, scoped, tag = 'input window, operand 0, single buffered']
    #allocation3 [shape = 's32[1]{0}', space=sflag, size = 0x4, scoped, tag = 'scoped memory for tpu_custom_call.1']
    #allocation4 [shape = 's32[1]{0}', space=sflag, size = 0x4, scoped, tag = 'scoped memory for tpu_custom_call.1']
    #allocation5 [shape = 'u8[65536]{0}', space=vmem, size = 0x10000, scoped, tag = 'input window, operand 1, single buffered']
    #allocation6 [shape = 's32[1]{0}', space=sflag, size = 0x4, scoped, tag = 'scoped memory for tpu_custom_call.1']
    #allocation7 [shape = 'u8[4096]{0}', space=vmem, size = 0x1000, scoped, tag = 'output window, operand 0, single buffered']
    %7 = vsyncpa [#allocation3], 0
    %8 = vsyncpa [#allocation6], 0
    %9 = vsyncpa [#allocation4], 0
    // Predicated region
    $region2: #{tpu_custom_call.1} parent=1 // pred_check
      _
    $region3: #{tpu_custom_call.1} parent=1 // pred_check_branch
      %11 = sbr.rel (0) target = $region5
    $region4: #{tpu_custom_call.1} parent=1 // pred_region
      %s13 = ssub.s32 128, 128
      %14 = vsyncadd [#allocation3], %s13
      %s16 = sshll.u32 [#allocation2], 4
      %s17 = int_to_ptr.vmem [resolvable:$true] %s16
      %19 = dma.hbm_to_vmem [thread:$0]  %s0, 128, %s17, [#allocation3]
    $region5: #{tpu_custom_call.1} parent=1 // pred_fallthru
      _
    // Predicated region
    $region6: #{tpu_custom_call.1} parent=1 // pred_check
      _
    $region7: #{tpu_custom_call.1} parent=1 // pred_check_branch
      %21 = sbr.rel (0) target = $region9
    $region8: #{tpu_custom_call.1} parent=1 // pred_region
      %s23 = ssub.s32 2048, 2048
      %24 = vsyncadd [#allocation6], %s23
      %s25 = sshll.u32 [#allocation5], 4
      %s26 = int_to_ptr.vmem [resolvable:$true] %s25
      %31 = dma.hbm_to_vmem [thread:$0]  %s1, 2048, %s26, [#allocation6], 128, 128, 8
    $region9: #{tpu_custom_call.1} parent=1 // pred_fallthru
      _
    // Predicated region
    $region10: #{tpu_custom_call.1} parent=1 // pred_check
      _
    $region11: #{tpu_custom_call.1} parent=1 // pred_check_branch
      %33 = sbr.rel (0) target = $region13
    $region12: #{tpu_custom_call.1} parent=1 // pred_region
      %34 = dma.done [#allocation3], 128
    $region13: #{tpu_custom_call.1} parent=1 // pred_fallthru
      _
    // Predicated region
    $region14: #{tpu_custom_call.1} parent=1 // pred_check
      _
    $region15: #{tpu_custom_call.1} parent=1 // pred_check_branch
      %36 = sbr.rel (0) target = $region17
    $region16: #{tpu_custom_call.1} parent=1 // pred_region
      %37 = dma.done [#allocation6], 2048
    $region17: #{tpu_custom_call.1} parent=1 // pred_fallthru
      _
    %v38 = vld [vmem:[#allocation2] sm:$0xff]
    %v39 = vld [vmem:[#allocation5] sm:$0xff]
    %v40 = vld [vmem:[#allocation5 + $0x8] sm:$0xff]
    %v41 = vld [vmem:[#allocation5 + $0x10] sm:$0xff]
    %v42 = vld [vmem:[#allocation5 + $0x18] sm:$0xff]
    %v43 = vld [vmem:[#allocation5 + $0x20] sm:$0xff]
    %v44 = vld [vmem:[#allocation5 + $0x28] sm:$0xff]
    %v45 = vld [vmem:[#allocation5 + $0x30] sm:$0xff]
    %v46 = vld [vmem:[#allocation5 + $0x38] sm:$0xff]
    %v47 = vld [vmem:[#allocation5 + $0x40] sm:$0xff]
    %v48 = vld [vmem:[#allocation5 + $0x48] sm:$0xff]
    %v49 = vld [vmem:[#allocation5 + $0x50] sm:$0xff]
    %v50 = vld [vmem:[#allocation5 + $0x58] sm:$0xff]
    %v51 = vld [vmem:[#allocation5 + $0x60] sm:$0xff]
    %v52 = vld [vmem:[#allocation5 + $0x68] sm:$0xff]
    %v53 = vld [vmem:[#allocation5 + $0x70] sm:$0xff]
    %v54 = vld [vmem:[#allocation5 + $0x78] sm:$0xff]
    %55 = vmatprep.subr.mxu0 0.0
    %56 = vmatpush1.msra.mxu0 %v39
    %57 = vmatprep.subr.mxu0 0.0
    %58 = vmatpush1.msra.mxu0 %v40
    %59 = vmatprep.subr.mxu0 0.0
    %60 = vmatpush1.msra.mxu0 %v41
    %61 = vmatprep.subr.mxu0 0.0
    %62 = vmatpush1.msra.mxu0 %v42
    %63 = vmatprep.subr.mxu0 0.0
    %64 = vmatpush1.msra.mxu0 %v43
    %65 = vmatprep.subr.mxu0 0.0
    %66 = vmatpush1.msra.mxu0 %v44
    %67 = vmatprep.subr.mxu0 0.0
    %68 = vmatpush1.msra.mxu0 %v45
    %69 = vmatprep.subr.mxu0 0.0
    %70 = vmatpush1.msra.mxu0 %v46
    %71 = vmatprep.subr.mxu0 0.0
    %72 = vmatpush1.msra.mxu0 %v47
    %73 = vmatprep.subr.mxu0 0.0
    %74 = vmatpush1.msra.mxu0 %v48
    %75 = vmatprep.subr.mxu0 0.0
    %76 = vmatpush1.msra.mxu0 %v49
    %77 = vmatprep.subr.mxu0 0.0
    %78 = vmatpush1.msra.mxu0 %v50
    %79 = vmatprep.subr.mxu0 0.0
    %80 = vmatpush1.msra.mxu0 %v51
    %81 = vmatprep.subr.mxu0 0.0
    %82 = vmatpush1.msra.mxu0 %v52
    %83 = vmatprep.subr.mxu0 0.0
    %84 = vmatpush1.msra.mxu0 %v53
    %85 = vmatprep.subr.mxu0 0.0
    %86 = vmatpush1.msra.mxu0 %v54
    %87 = vmatprep.subr.mxu0 0.0
    %88 = vmatpush1.msra.mxu0 0.0
    %89 = vmatprep.subr.mxu0 0.0
    %90 = vmatpush1.msra.mxu0 0.0
    %91 = vmatprep.subr.mxu0 0.0
    %92 = vmatpush1.msra.mxu0 0.0
    %93 = vmatprep.subr.mxu0 0.0
    %94 = vmatpush1.msra.mxu0 0.0
    %95 = vmatprep.subr.mxu0 0.0
    %96 = vmatpush1.msra.mxu0 0.0
    %97 = vmatprep.subr.mxu0 0.0
    %98 = vmatpush1.msra.mxu0 0.0
    %99 = vmatprep.subr.mxu0 0.0
    %100 = vmatpush1.msra.mxu0 0.0
    %101 = vmatprep.subr.mxu0 0.0
    %102 = vmatpush1.msra.mxu0 0.0
    %103 = vmatprep.subr.mxu0 0.0
    %104 = vmatpush1.msra.mxu0 0.0
    %105 = vmatprep.subr.mxu0 0.0
    %106 = vmatpush1.msra.mxu0 0.0
    %107 = vmatprep.subr.mxu0 0.0
    %108 = vmatpush1.msra.mxu0 0.0
    %109 = vmatprep.subr.mxu0 0.0
    %110 = vmatpush1.msra.mxu0 0.0
    %111 = vmatprep.subr.mxu0 0.0
    %112 = vmatpush1.msra.mxu0 0.0
    %113 = vmatprep.subr.mxu0 0.0
    %114 = vmatpush1.msra.mxu0 0.0
    %115 = vmatprep.subr.mxu0 0.0
    %116 = vmatpush1.msra.mxu0 0.0
    %117 = vmatprep.subr.mxu0 0.0
    %118 = vmatpush1.msra.mxu0 0.0
    %119 = vmatprep.mubr.f32.mxu0 0.0
    %120 = vmatmul.mubr.f32.gmra.mrb[0].mxu0 %v38
    %v121 = vpop.f32.mrb[0].mxu0
    %v122 = vadd.f32 0.0, %v121
    %v123 = vpop.f32.mrb[0].mxu0
    %124 = vdwg.mxu0
    %125 = vst [vmem:[#allocation7] sm:$0xff] %v122
    // Predicated region
    $region18: #{tpu_custom_call.1} parent=1 // pred_check
      _
    $region19: #{tpu_custom_call.1} parent=1 // pred_check_branch
      %127 = sbr.rel (0) target = $region21
    $region20: #{tpu_custom_call.1} parent=1 // pred_region
      %s129 = ssub.s32 128, 128
      %130 = vsyncadd [#allocation4], %s129
      %s132 = sshll.u32 [#allocation7], 4
      %s133 = int_to_ptr.vmem [resolvable:$true] %s132
      %135 = dma.vmem_to_hbm [thread:$0]  %s133, 128, %s2, [#allocation4]
    $region21: #{tpu_custom_call.1} parent=1 // pred_fallthru
      _
    // Predicated region
    $region22: #{tpu_custom_call.1} parent=1 // pred_check
      _
    $region23: #{tpu_custom_call.1} parent=1 // pred_check_branch
      %137 = sbr.rel (0) target = $region25
    $region24: #{tpu_custom_call.1} parent=1 // pred_region
      %138 = dma.done [#allocation4], 128
    $region25: #{tpu_custom_call.1} parent=1 // pred_fallthru
      _
    %139 = vsyncpa [#allocation3], 1
    %140 = vsyncpa [#allocation6], 1
    %141 = vsyncpa [#allocation4], 1

</llo_original>
